<compile_context>
chip_gen: v6e
topology: v6e:2x2x1
jax: 0.10.0
libtpu: 0.0.40
codegen_flags: <defaults>
</compile_context>

<pallas_src>
import jax
import jax.numpy as jnp
from jax.experimental import pallas as pl
from jax.experimental.pallas import tpu as pltpu

_LANE = 128
_SUBLANE = 8
_MAX_BLOCK_ROWS = 1024   # 1024 x 128 = 128K pixels (~512 KiB f32) per tile


def _make_fused_tanh_kernel(c_hidden):
    """Kernel over a (block_rows, 128) pixel tile.

    p_ref (SMEM, 1D f32[3*c_hidden + 1]) = [w12 | b12 | w3 | b3].
    """
    def kernel(x_ref, p_ref, o_ref):
        x = x_ref[...]                                  # (BR, 128) pixels
        acc = jnp.zeros_like(x)
        for c in range(c_hidden):                       # unrolled channel loop
            w12_c = p_ref[c]
            b12_c = p_ref[c_hidden + c]
            w3_c = p_ref[2 * c_hidden + c]
            acc = acc + jnp.tanh(x * w12_c + b12_c) * w3_c
        o_ref[...] = acc + p_ref[3 * c_hidden]          # + b3
    return kernel


def model_tanh_forward(x_nchw, params):
    """x_nchw: (N, 1, H, W) float32 -> (N, 1, H, W) float32."""
    w1, b1, w2, b2, w3, b3 = params
    n, c_in, h, w = x_nchw.shape
    assert c_in == 1
    m = n * h * w
    c_hidden = w2.shape[1]                              # 8

    # Algebraic fusion of conv1 & conv2 (exact; no nonlinearity between them):
    #   (x*w1 + b1) @ w2 + b2  ==  x * (w1 @ w2) + (b1 @ w2 + b2)
    w12 = (w1 @ w2).reshape(c_hidden)
    b12 = (b1 @ w2 + b2).reshape(c_hidden)
    w3v = w3.reshape(c_hidden)
    pvec = jnp.concatenate(
        [w12, b12, w3v, b3.reshape(1)]).astype(jnp.float32)   # (3*C + 1,)

    # Pixel-dense layout: (rows, 128), rows padded so the grid divides evenly.
    rows = pl.cdiv(m, _LANE)
    if rows <= _SUBLANE:
        # Single tiny tile; block == full array dims (no x8 requirement).
        block_rows = rows
        rows_pad = rows
    else:
        # Tile rows in multiples of 8; keep >= 2 grid steps when possible so
        # dimension_semantics=("parallel",) shards across v7x's 2 TensorCores.
        half = pl.cdiv(rows, 2)
        block_rows = min(_MAX_BLOCK_ROWS, pl.cdiv(half, _SUBLANE) * _SUBLANE)
        rows_pad = pl.cdiv(rows, block_rows) * block_rows

    m_pad = rows_pad * _LANE
    x_flat = x_nchw.reshape(-1).astype(jnp.float32)
    if m_pad != m:
        x_flat = jnp.pad(x_flat, (0, m_pad - m))
    x2d = x_flat.reshape(rows_pad, _LANE)

    out2d = pl.pallas_call(
        _make_fused_tanh_kernel(c_hidden),
        out_shape=jax.ShapeDtypeStruct((rows_pad, _LANE), jnp.float32),
        grid=(rows_pad // block_rows,),
        in_specs=[
            pl.BlockSpec((block_rows, _LANE), lambda i: (i, 0)),     # pixels
            pl.BlockSpec(memory_space=pltpu.MemorySpace.SMEM),       # params
        ],
        out_specs=pl.BlockSpec((block_rows, _LANE), lambda i: (i, 0)),
        compiler_params=pltpu.CompilerParams(
            dimension_semantics=("parallel",)),
    )(x2d, pvec)

    # Drop pad, back to NCHW (C_out == 1, so a plain reshape suffices).
    return out2d.reshape(-1)[:m].reshape(n, 1, h, w)


def init_params(key):
    """Deterministic params mirroring Conv2d(1,8,1), Conv2d(8,8,1), Conv2d(8,1,1).

    Torch Conv2d weights are (C_out, C_in, 1, 1); stored transposed as
    (C_in, C_out) since a 1x1 conv is a per-pixel channel matmul.
    """
    k1, k2, k3, k4, k5, k6 = jax.random.split(key, 6)
    w1 = jax.random.normal(k1, (1, 8), jnp.float32) * 0.5
    b1 = jax.random.normal(k2, (8,), jnp.float32) * 0.1
    w2 = jax.random.normal(k3, (8, 8), jnp.float32) * 0.2
    b2 = jax.random.normal(k4, (8,), jnp.float32) * 0.1
    w3 = jax.random.normal(k5, (8, 1), jnp.float32) * 0.3
    b3 = jax.random.normal(k6, (1,), jnp.float32) * 0.1
    return (w1, b1, w2, b2, w3, b3)


def _reference(x_nchw, params):
    w1, b1, w2, b2, w3, b3 = params
    n, c, h, w = x_nchw.shape
    xf = jnp.transpose(x_nchw, (0, 2, 3, 1)).reshape(-1, c)
    h1 = xf @ w1 + b1
    h2 = jnp.tanh(h1 @ w2 + b2)
    o = h2 @ w3 + b3
    return jnp.transpose(o.reshape(n, h, w, -1), (0, 3, 1, 2))


if __name__ == "__main__":
    key = jax.random.PRNGKey(0)
    kx, kp = jax.random.split(key)
    x1 = jax.random.normal(kx, (1, 1, 28, 28), jnp.float32)
    params = init_params(kp)

    out = model_tanh_forward(x1, params)
    out = jax.block_until_ready(out)

    ref = _reference(x1, params)
    assert out.shape == (1, 1, 28, 28), out.shape
    assert jnp.allclose(out, ref, atol=1e-5, rtol=1e-5), "mismatch vs reference"
    print("KERNEL_OK")
</pallas_src>

<mosaic_0001>
module attributes {stable_mosaic.version = 11 : i64} {
  func.func @kernel(%arg0: i32, %arg1: memref<7x128xf32, #tpu.memory_space<vmem>>, %arg2: memref<25xf32, #tpu.memory_space<smem>>, %arg3: memref<7x128xf32, #tpu.memory_space<vmem>>) attributes {dimension_semantics = [#tpu.dimension_semantics<parallel>], iteration_bounds = array<i64: 1>, scalar_prefetch = 0 : i64, scratch_operands = 0 : i64, tpu.core_type = #tpu.core_type<tc>, window_params = [{transform_indices = @transform_0, window_bounds = array<i64: 7, 128>}, {transform_indices = @transform_1, window_bounds = array<i64: 25>}, {transform_indices = @transform_2, window_bounds = array<i64: 7, 128>}]} {
    %c0 = arith.constant 0 : index
    %c0_0 = arith.constant 0 : index
    %0 = vector.load %arg1[%c0, %c0_0] : memref<7x128xf32, #tpu.memory_space<vmem>>, vector<7x128xf32>
    %cst = arith.constant 0.000000e+00 : f32
    %1 = vector.broadcast %cst : f32 to vector<7x128xf32>
    %c0_1 = arith.constant 0 : index
    %2 = memref.load %arg2[%c0_1] : memref<25xf32, #tpu.memory_space<smem>>
    %c8 = arith.constant 8 : index
    %3 = memref.load %arg2[%c8] : memref<25xf32, #tpu.memory_space<smem>>
    %c16 = arith.constant 16 : index
    %4 = memref.load %arg2[%c16] : memref<25xf32, #tpu.memory_space<smem>>
    %5 = vector.broadcast %2 : f32 to vector<7x128xf32>
    %6 = arith.mulf %0, %5 : vector<7x128xf32>
    %7 = vector.broadcast %3 : f32 to vector<7x128xf32>
    %8 = arith.addf %6, %7 : vector<7x128xf32>
    %9 = math.tanh %8 : vector<7x128xf32>
    %10 = vector.broadcast %4 : f32 to vector<7x128xf32>
    %11 = arith.mulf %9, %10 : vector<7x128xf32>
    %12 = arith.addf %1, %11 : vector<7x128xf32>
    %c1 = arith.constant 1 : index
    %13 = memref.load %arg2[%c1] : memref<25xf32, #tpu.memory_space<smem>>
    %c9 = arith.constant 9 : index
    %14 = memref.load %arg2[%c9] : memref<25xf32, #tpu.memory_space<smem>>
    %c17 = arith.constant 17 : index
    %15 = memref.load %arg2[%c17] : memref<25xf32, #tpu.memory_space<smem>>
    %16 = vector.broadcast %13 : f32 to vector<7x128xf32>
    %17 = arith.mulf %0, %16 : vector<7x128xf32>
    %18 = vector.broadcast %14 : f32 to vector<7x128xf32>
    %19 = arith.addf %17, %18 : vector<7x128xf32>
    %20 = math.tanh %19 : vector<7x128xf32>
    %21 = vector.broadcast %15 : f32 to vector<7x128xf32>
    %22 = arith.mulf %20, %21 : vector<7x128xf32>
    %23 = arith.addf %12, %22 : vector<7x128xf32>
    %c2 = arith.constant 2 : index
    %24 = memref.load %arg2[%c2] : memref<25xf32, #tpu.memory_space<smem>>
    %c10 = arith.constant 10 : index
    %25 = memref.load %arg2[%c10] : memref<25xf32, #tpu.memory_space<smem>>
    %c18 = arith.constant 18 : index
    %26 = memref.load %arg2[%c18] : memref<25xf32, #tpu.memory_space<smem>>
    %27 = vector.broadcast %24 : f32 to vector<7x128xf32>
    %28 = arith.mulf %0, %27 : vector<7x128xf32>
    %29 = vector.broadcast %25 : f32 to vector<7x128xf32>
    %30 = arith.addf %28, %29 : vector<7x128xf32>
    %31 = math.tanh %30 : vector<7x128xf32>
    %32 = vector.broadcast %26 : f32 to vector<7x128xf32>
    %33 = arith.mulf %31, %32 : vector<7x128xf32>
    %34 = arith.addf %23, %33 : vector<7x128xf32>
    %c3 = arith.constant 3 : index
    %35 = memref.load %arg2[%c3] : memref<25xf32, #tpu.memory_space<smem>>
    %c11 = arith.constant 11 : index
    %36 = memref.load %arg2[%c11] : memref<25xf32, #tpu.memory_space<smem>>
    %c19 = arith.constant 19 : index
    %37 = memref.load %arg2[%c19] : memref<25xf32, #tpu.memory_space<smem>>
    %38 = vector.broadcast %35 : f32 to vector<7x128xf32>
    %39 = arith.mulf %0, %38 : vector<7x128xf32>
    %40 = vector.broadcast %36 : f32 to vector<7x128xf32>
    %41 = arith.addf %39, %40 : vector<7x128xf32>
    %42 = math.tanh %41 : vector<7x128xf32>
    %43 = vector.broadcast %37 : f32 to vector<7x128xf32>
    %44 = arith.mulf %42, %43 : vector<7x128xf32>
    %45 = arith.addf %34, %44 : vector<7x128xf32>
    %c4 = arith.constant 4 : index
    %46 = memref.load %arg2[%c4] : memref<25xf32, #tpu.memory_space<smem>>
    %c12 = arith.constant 12 : index
    %47 = memref.load %arg2[%c12] : memref<25xf32, #tpu.memory_space<smem>>
    %c20 = arith.constant 20 : index
    %48 = memref.load %arg2[%c20] : memref<25xf32, #tpu.memory_space<smem>>
    %49 = vector.broadcast %46 : f32 to vector<7x128xf32>
    %50 = arith.mulf %0, %49 : vector<7x128xf32>
    %51 = vector.broadcast %47 : f32 to vector<7x128xf32>
    %52 = arith.addf %50, %51 : vector<7x128xf32>
    %53 = math.tanh %52 : vector<7x128xf32>
    %54 = vector.broadcast %48 : f32 to vector<7x128xf32>
    %55 = arith.mulf %53, %54 : vector<7x128xf32>
    %56 = arith.addf %45, %55 : vector<7x128xf32>
    %c5 = arith.constant 5 : index
    %57 = memref.load %arg2[%c5] : memref<25xf32, #tpu.memory_space<smem>>
    %c13 = arith.constant 13 : index
    %58 = memref.load %arg2[%c13] : memref<25xf32, #tpu.memory_space<smem>>
    %c21 = arith.constant 21 : index
    %59 = memref.load %arg2[%c21] : memref<25xf32, #tpu.memory_space<smem>>
    %60 = vector.broadcast %57 : f32 to vector<7x128xf32>
    %61 = arith.mulf %0, %60 : vector<7x128xf32>
    %62 = vector.broadcast %58 : f32 to vector<7x128xf32>
    %63 = arith.addf %61, %62 : vector<7x128xf32>
    %64 = math.tanh %63 : vector<7x128xf32>
    %65 = vector.broadcast %59 : f32 to vector<7x128xf32>
    %66 = arith.mulf %64, %65 : vector<7x128xf32>
    %67 = arith.addf %56, %66 : vector<7x128xf32>
    %c6 = arith.constant 6 : index
    %68 = memref.load %arg2[%c6] : memref<25xf32, #tpu.memory_space<smem>>
    %c14 = arith.constant 14 : index
    %69 = memref.load %arg2[%c14] : memref<25xf32, #tpu.memory_space<smem>>
    %c22 = arith.constant 22 : index
    %70 = memref.load %arg2[%c22] : memref<25xf32, #tpu.memory_space<smem>>
    %71 = vector.broadcast %68 : f32 to vector<7x128xf32>
    %72 = arith.mulf %0, %71 : vector<7x128xf32>
    %73 = vector.broadcast %69 : f32 to vector<7x128xf32>
    %74 = arith.addf %72, %73 : vector<7x128xf32>
    %75 = math.tanh %74 : vector<7x128xf32>
    %76 = vector.broadcast %70 : f32 to vector<7x128xf32>
    %77 = arith.mulf %75, %76 : vector<7x128xf32>
    %78 = arith.addf %67, %77 : vector<7x128xf32>
    %c7 = arith.constant 7 : index
    %79 = memref.load %arg2[%c7] : memref<25xf32, #tpu.memory_space<smem>>
    %c15 = arith.constant 15 : index
    %80 = memref.load %arg2[%c15] : memref<25xf32, #tpu.memory_space<smem>>
    %c23 = arith.constant 23 : index
    %81 = memref.load %arg2[%c23] : memref<25xf32, #tpu.memory_space<smem>>
    %82 = vector.broadcast %79 : f32 to vector<7x128xf32>
    %83 = arith.mulf %0, %82 : vector<7x128xf32>
    %84 = vector.broadcast %80 : f32 to vector<7x128xf32>
    %85 = arith.addf %83, %84 : vector<7x128xf32>
    %86 = math.tanh %85 : vector<7x128xf32>
    %87 = vector.broadcast %81 : f32 to vector<7x128xf32>
    %88 = arith.mulf %86, %87 : vector<7x128xf32>
    %89 = arith.addf %78, %88 : vector<7x128xf32>
    %c24 = arith.constant 24 : index
    %90 = memref.load %arg2[%c24] : memref<25xf32, #tpu.memory_space<smem>>
    %91 = vector.broadcast %90 : f32 to vector<7x128xf32>
    %92 = arith.addf %89, %91 : vector<7x128xf32>
    %c0_2 = arith.constant 0 : index
    %c0_3 = arith.constant 0 : index
    %93 = vector.load %arg3[%c0_2, %c0_3] : memref<7x128xf32, #tpu.memory_space<vmem>>, vector<7x128xf32>
    tpu.vector_store %arg3[%c0_2, %c0_3], %92 {strides = array<i32>} : memref<7x128xf32, #tpu.memory_space<vmem>>, vector<7x128xf32>,
    return
  }
  func.func @transform_0(%arg0: i32) -> (i32, i32) {
    %c0_i32 = arith.constant 0 : i32
    %c0_i32_0 = arith.constant 0 : i32
    return %arg0, %c0_i32 : i32, i32
  }
  func.func @transform_1(%arg0: i32) -> i32 {
    %c0_i32 = arith.constant 0 : i32
    %c0_i32_0 = arith.constant 0 : i32
    return %c0_i32 : i32
  }
  func.func @transform_2(%arg0: i32) -> (i32, i32) {
    %c0_i32 = arith.constant 0 : i32
    %c0_i32_0 = arith.constant 0 : i32
    return %arg0, %c0_i32 : i32, i32
  }
}

</mosaic_0001>

<llo_original>
// kernel: tpu_custom_call.1
$region0: #{tpu_custom_call.1}
  #allocation0 [shape = 'u32[]', space=smem, size = 0x4, offset = 0x4, fixed_abs, tag = 'smem constant byte address 0x4 - core index']
  #allocation1 [shape = 'u32[144,128]{1,0:T(1,128)}', space=vmem, size = 0x12000, scoped, tag = 'internal scratch']
  %s0 = inlined_call_operand.hbm [shape: f32[7,128], index: 0, kind: input, shape index: {}]
  %s1 = inlined_call_operand.vmem [shape: f32[25], index: 1, kind: input, shape index: {}]
  %s2 = inlined_call_operand.hbm [shape: f32[7,128], index: 2, kind: output, shape index: {}]
  %s3 = sld [smem:[#allocation0]]
  $region26: #{tpu_custom_call.1} parent=0
    _
  %s5 = ssub.s32 1, %s3
  %s6 = scalar_select 0, %s5, %s3
  $region1: #{tpu_custom_call.1} parent=0
    #allocation2 [shape = 'u8[4096]{0}', space=vmem, size = 0x1000, scoped, tag = 'input window, operand 0, single buffered']
    #allocation3 [shape = 's32[1]{0}', space=sflag, size = 0x4, scoped, tag = 'scoped memory for tpu_custom_call.1']
    #allocation4 [shape = 's32[1]{0}', space=sflag, size = 0x4, scoped, tag = 'scoped memory for tpu_custom_call.1']
    #allocation5 [shape = 's32[1]{0}', space=sflag, size = 0x4, scoped, tag = 'scoped memory for tpu_custom_call.1']
    #allocation6 [shape = 'u8[512]{0}', space=smem, size = 0x200, scoped, tag = 'input window, operand 1, single buffered']
    #allocation7 [shape = 'u8[4096]{0}', space=vmem, size = 0x1000, scoped, tag = 'output window, operand 0, single buffered']
    %7 = vsyncpa [#allocation3], 0
    %8 = vsyncpa [#allocation5], 0
    %9 = vsyncpa [#allocation4], 0
    // Predicated region
    $region2: #{tpu_custom_call.1} parent=1 // pred_check
      _
    $region3: #{tpu_custom_call.1} parent=1 // pred_check_branch
      %11 = sbr.rel (0) target = $region5
    $region4: #{tpu_custom_call.1} parent=1 // pred_region
      %s13 = ssub.s32 128, 128
      %14 = vsyncadd [#allocation3], %s13
      %s16 = sshll.u32 [#allocation2], 4
      %s17 = int_to_ptr.vmem [resolvable:$true] %s16
      %19 = dma.hbm_to_vmem [thread:$0]  %s0, 128, %s17, [#allocation3]
    $region5: #{tpu_custom_call.1} parent=1 // pred_fallthru
      _
    // Predicated region
    $region6: #{tpu_custom_call.1} parent=1 // pred_check
      _
    $region7: #{tpu_custom_call.1} parent=1 // pred_check_branch
      %21 = sbr.rel (0) target = $region9
    $region8: #{tpu_custom_call.1} parent=1 // pred_region
      %s23 = ssub.s32 16, 16
      %24 = vsyncadd [#allocation5], %s23
      %s26 = sshll.u32 %s1, 4
      %s27 = int_to_ptr.vmem [resolvable:$true] %s26
      %29 = dma.vmem_to_smem %s27, 16, [#allocation6], [#allocation5]
    $region9: #{tpu_custom_call.1} parent=1 // pred_fallthru
      _
    // Predicated region
    $region10: #{tpu_custom_call.1} parent=1 // pred_check
      _
    $region11: #{tpu_custom_call.1} parent=1 // pred_check_branch
      %31 = sbr.rel (0) target = $region13
    $region12: #{tpu_custom_call.1} parent=1 // pred_region
      %32 = dma.done [#allocation3], 128
    $region13: #{tpu_custom_call.1} parent=1 // pred_fallthru
      _
    // Predicated region
    $region14: #{tpu_custom_call.1} parent=1 // pred_check
      _
    $region15: #{tpu_custom_call.1} parent=1 // pred_check_branch
      %34 = sbr.rel (0) target = $region17
    $region16: #{tpu_custom_call.1} parent=1 // pred_region
      %35 = dma.done [#allocation5], 16
    $region17: #{tpu_custom_call.1} parent=1 // pred_fallthru
      _
    %36 = sfence
    %v37 = vld [vmem:[#allocation2] sm:$0x7f]
    %s38 = sld [smem:[#allocation6]]
    %s39 = sld [smem:[#allocation6 + $0x8]]
    %s40 = sld [smem:[#allocation6 + $0x10]]
    %v41 = vstv %s38
    %v42 = vmul.f32 %v37, %v41
    %v43 = vstv %s39
    %v44 = vadd.f32 %v42, %v43
    %v45 = vtanh.pop %v44
    %v46 = vstv %s40
    %v47 = vmul.f32 %v45, %v46
    %v48 = vadd.f32 %v47, 0.0
    %s49 = sld [smem:[#allocation6 + $0x1]]
    %s50 = sld [smem:[#allocation6 + $0x9]]
    %s51 = sld [smem:[#allocation6 + $0x11]]
    %v52 = vstv %s49
    %v53 = vmul.f32 %v37, %v52
    %v54 = vstv %s50
    %v55 = vadd.f32 %v53, %v54
    %v56 = vtanh.pop %v55
    %v57 = vstv %s51
    %v58 = vmul.f32 %v56, %v57
    %v59 = vadd.f32 %v48, %v58
    %s60 = sld [smem:[#allocation6 + $0x2]]
    %s61 = sld [smem:[#allocation6 + $0xa]]
    %s62 = sld [smem:[#allocation6 + $0x12]]
    %v63 = vstv %s60
    %v64 = vmul.f32 %v37, %v63
    %v65 = vstv %s61
    %v66 = vadd.f32 %v64, %v65
    %v67 = vtanh.pop %v66
    %v68 = vstv %s62
    %v69 = vmul.f32 %v67, %v68
    %v70 = vadd.f32 %v59, %v69
    %s71 = sld [smem:[#allocation6 + $0x3]]
    %s72 = sld [smem:[#allocation6 + $0xb]]
    %s73 = sld [smem:[#allocation6 + $0x13]]
    %v74 = vstv %s71
    %v75 = vmul.f32 %v37, %v74
    %v76 = vstv %s72
    %v77 = vadd.f32 %v75, %v76
    %v78 = vtanh.pop %v77
    %v79 = vstv %s73
    %v80 = vmul.f32 %v78, %v79
    %v81 = vadd.f32 %v70, %v80
    %s82 = sld [smem:[#allocation6 + $0x4]]
    %s83 = sld [smem:[#allocation6 + $0xc]]
    %s84 = sld [smem:[#allocation6 + $0x14]]
    %v85 = vstv %s82
    %v86 = vmul.f32 %v37, %v85
    %v87 = vstv %s83
    %v88 = vadd.f32 %v86, %v87
    %v89 = vtanh.pop %v88
    %v90 = vstv %s84
    %v91 = vmul.f32 %v89, %v90
    %v92 = vadd.f32 %v81, %v91
    %s93 = sld [smem:[#allocation6 + $0x5]]
    %s94 = sld [smem:[#allocation6 + $0xd]]
    %s95 = sld [smem:[#allocation6 + $0x15]]
    %v96 = vstv %s93
    %v97 = vmul.f32 %v37, %v96
    %v98 = vstv %s94
    %v99 = vadd.f32 %v97, %v98
    %v100 = vtanh.pop %v99
    %v101 = vstv %s95
    %v102 = vmul.f32 %v100, %v101
    %v103 = vadd.f32 %v92, %v102
    %s104 = sld [smem:[#allocation6 + $0x6]]
    %s105 = sld [smem:[#allocation6 + $0xe]]
    %s106 = sld [smem:[#allocation6 + $0x16]]
    %v107 = vstv %s104
    %v108 = vmul.f32 %v37, %v107
    %v109 = vstv %s105
    %v110 = vadd.f32 %v108, %v109
    %v111 = vtanh.pop %v110
    %v112 = vstv %s106
    %v113 = vmul.f32 %v111, %v112
    %v114 = vadd.f32 %v103, %v113
    %s115 = sld [smem:[#allocation6 + $0x7]]
    %s116 = sld [smem:[#allocation6 + $0xf]]
    %s117 = sld [smem:[#allocation6 + $0x17]]
    %v118 = vstv %s115
    %v119 = vmul.f32 %v37, %v118
    %v120 = vstv %s116
    %v121 = vadd.f32 %v119, %v120
    %v122 = vtanh.pop %v121
    %v123 = vstv %s117
    %v124 = vmul.f32 %v122, %v123
    %v125 = vadd.f32 %v114, %v124
    %s126 = sld [smem:[#allocation6 + $0x18]]
    %v127 = vstv %s126
    %v128 = vadd.f32 %v125, %v127
    %129 = vst [vmem:[#allocation7] sm:$0x7f] %v128
    // Predicated region
    $region18: #{tpu_custom_call.1} parent=1 // pred_check
      _
    $region19: #{tpu_custom_call.1} parent=1 // pred_check_branch
      %131 = sbr.rel (0) target = $region21
    $region20: #{tpu_custom_call.1} parent=1 // pred_region
      %s133 = ssub.s32 128, 128
      %134 = vsyncadd [#allocation4], %s133
      %s136 = sshll.u32 [#allocation7], 4
      %s137 = int_to_ptr.vmem [resolvable:$true] %s136
      %139 = dma.vmem_to_hbm [thread:$0]  %s137, 128, %s2, [#allocation4]
    $region21: #{tpu_custom_call.1} parent=1 // pred_fallthru
      _
    // Predicated region
    $region22: #{tpu_custom_call.1} parent=1 // pred_check
      _
    $region23: #{tpu_custom_call.1} parent=1 // pred_check_branch
      %141 = sbr.rel (0) target = $region25
    $region24: #{tpu_custom_call.1} parent=1 // pred_region
      %142 = dma.done [#allocation4], 128
    $region25: #{tpu_custom_call.1} parent=1 // pred_fallthru
      _
    %143 = vsyncpa [#allocation3], 1
    %144 = vsyncpa [#allocation4], 1
    %145 = vsyncpa [#allocation5], 1

</llo_original>
